<compile_context>
chip_gen: v6e
topology: v6e:2x2x1
jax: 0.10.0
libtpu: 0.0.40
codegen_flags: <defaults>
</compile_context>

<pallas_src>
import functools

import jax
import jax.numpy as jnp
from jax.experimental import pallas as pl
from jax.experimental.pallas import tpu as pltpu


def _basic_conv1d_kernel(x_ref, w_ref, scale_ref, shift_ref, o_ref):
    # x_ref:     (C_in, W)          packed activations, W = segs_per_blk * 128 (compute dtype)
    # w_ref:     (K, C_out, C_in)   conv weight, resident across the grid (compute dtype)
    # scale_ref: (C_out, 1)         BN scale  gamma / sqrt(var + eps)            (f32)
    # shift_ref: (C_out, 1)         BN shift  beta - mean * scale                (f32)
    # o_ref:     (C_out, W)         lane-dense output block
    x = x_ref[...]                                   # one aligned load of the block
    W = x.shape[1]
    K = w_ref.shape[0]

    # Tap 0.
    y = jnp.dot(w_ref[0], x, preferred_element_type=jnp.float32)
    # Taps 1..K-1: circular left shift by t (== jnp.roll(x, -t, axis=1)) via the XLU.
    # Valid output columns only ever read within their own batch-element span
    # (c + t <= L_pad - 1); wrapped columns land in dead columns the wrapper discards.
    for t in range(1, K):
        x_t = pltpu.roll(x, W - t, axis=1)
        y = y + jnp.dot(w_ref[t], x_t, preferred_element_type=jnp.float32)

    # Eval-mode BatchNorm (f32 epilogue on all generations) + ReLU.
    y = y * scale_ref[...] + shift_ref[...]
    o_ref[...] = jnp.maximum(y, 0.0).astype(o_ref.dtype)


def _choose_segs_per_block(n_segs, seg_lanes, lane_budget, min_grid_steps=2):
    """Largest divisor of n_segs whose lane width fits the budget, preferring tilings
    that leave >= min_grid_steps grid steps (so v7x's two TensorCores both get work)."""
    fits = [d for d in range(1, n_segs + 1)
            if n_segs % d == 0 and d * seg_lanes <= lane_budget]
    if not fits:
        # A single segment already exceeds the budget: clamp to 1 segment per step;
        # the derived vmem_limit below is computed from the actual block size.
        return 1
    keeps_mc = [d for d in fits if n_segs // d >= min_grid_steps]
    return max(keeps_mc) if keeps_mc else max(fits)


def _derive_vmem_limit(C_in, C_out, K, W_blk, compute_dtype, out_dtype):
    """Scoped-VMEM limit from the actual per-step footprint (not a hardcoded 32 MiB)."""
    cb = jnp.dtype(compute_dtype).itemsize
    ob = jnp.dtype(out_dtype).itemsize
    per_step = (2 * C_in * W_blk * cb              # double-buffered packed-x block
                + 2 * C_out * W_blk * ob           # double-buffered output block
                + (K - 1) * C_in * W_blk * cb      # rolled-tap temporaries
                + C_out * W_blk * 4                # f32 accumulator
                + K * C_out * C_in * cb            # weight (resident)
                + 2 * C_out * 4)                   # BN scale + shift
    limit = 2 * per_step + (4 << 20)               # 2x + 4 MiB headroom for compiler temps
    # Floor at the smallest scoped default (16 MiB, v5e); cap at a v7x-safe 64 MiB.
    return int(min(max(limit, 16 << 20), 64 << 20))


def prepare_basic_conv1d_params(weight, gamma, beta, running_mean, running_var,
                                *, eps=1e-3, compute_dtype=jnp.bfloat16):
    """One-time (parameter-time) prep: weight relayout + BN folding. Not in the hot path."""
    C_out, C_in, K = weight.shape
    scale = (gamma / jnp.sqrt(running_var + eps)).astype(jnp.float32)
    shift = (beta - running_mean * scale).astype(jnp.float32)
    # Keep the weight UNscaled: BN scale is applied in the f32 epilogue so a small
    # running_var cannot amplify bf16 weight quantization error.
    w_koc = jnp.transpose(weight, (2, 0, 1)).astype(compute_dtype)   # (K, C_out, C_in)
    return w_koc, scale.reshape(C_out, 1), shift.reshape(C_out, 1)


@functools.partial(
    jax.jit,
    static_argnames=("padding", "compute_dtype", "out_dtype", "lane_budget"))
def basic_conv1d(x, w_koc, scale, shift, *, padding=1,
                 compute_dtype=jnp.bfloat16, out_dtype=jnp.float32,
                 lane_budget=32 * 1024):
    """x: (N, C_in, L) f32; w_koc/scale/shift from prepare_basic_conv1d_params.

    stride=1, dilation=1 only (Laplace_Inception's BasicConv1d usage)."""
    N, C_in, L = x.shape
    K, C_out, _ = w_koc.shape
    L_pad = L + 2 * padding
    L_out = L_pad - K + 1
    assert L_out >= 1

    # ---- segment geometry: pack as many batch elements as fit per 128-lane segment ----
    if L_pad <= 128:
        P = 128 // L_pad                      # batch elements per 128-lane segment
        SEG = 128
    else:
        P = 1
        SEG = ((L_pad + 127) // 128) * 128    # long sequences: one element per segment
    n_segs = -(-N // P)
    N_pad = n_segs * P

    # ---- layout plumbing (inside jit => fused by XLA into one pass, no extra round trips)
    x_pad = jnp.pad(x, ((0, N_pad - N), (0, 0), (padding, padding)))      # (N_pad, C_in, L_pad)
    x_g = x_pad.reshape(n_segs, P, C_in, L_pad).transpose(2, 0, 1, 3)     # (C_in, n_segs, P, L_pad)
    x_g = x_g.reshape(C_in, n_segs, P * L_pad)
    x_packed = jnp.pad(x_g, ((0, 0), (0, 0), (0, SEG - P * L_pad)))       # (C_in, n_segs, SEG)
    x_packed = x_packed.reshape(C_in, n_segs * SEG).astype(compute_dtype)

    # ---- tiling: whole 128-lane segments per grid step ----
    segs_per_blk = _choose_segs_per_block(n_segs, SEG, lane_budget)
    W_blk = segs_per_blk * SEG                # always a multiple of 128 -> unmasked stores
    grid = (n_segs // segs_per_blk,)
    vmem_limit = _derive_vmem_limit(C_in, C_out, K, W_blk, compute_dtype, out_dtype)

    y_packed = pl.pallas_call(
        _basic_conv1d_kernel,
        out_shape=jax.ShapeDtypeStruct((C_out, n_segs * SEG), out_dtype),
        grid_spec=pltpu.PrefetchScalarGridSpec(
            num_scalar_prefetch=0,
            grid=grid,
            in_specs=[
                pl.BlockSpec((C_in, W_blk), lambda b: (0, b)),          # packed activations
                pl.BlockSpec((K, C_out, C_in), lambda b: (0, 0, 0)),    # conv weight (resident)
                pl.BlockSpec((C_out, 1), lambda b: (0, 0)),             # BN scale
                pl.BlockSpec((C_out, 1), lambda b: (0, 0)),             # BN shift
            ],
            out_specs=pl.BlockSpec((C_out, W_blk), lambda b: (0, b)),
        ),
        compiler_params=pltpu.CompilerParams(
            dimension_semantics=("parallel",),
            vmem_limit_bytes=vmem_limit,
        ),
    )(x_packed, w_koc, scale, shift)

    # ---- unpack: drop dead columns, restore (N, C_out, L_out) ----
    y = y_packed.reshape(C_out, n_segs, SEG)[:, :, :P * L_pad]
    y = y.reshape(C_out, n_segs, P, L_pad)[:, :, :, :L_out]
    y = y.reshape(C_out, N_pad, L_out)[:, :N, :]
    return jnp.transpose(y, (1, 0, 2))


def _reference(x, weight, gamma, beta, running_mean, running_var,
               *, padding=1, eps=1e-3):
    y = jax.lax.conv_general_dilated(
        x, weight, window_strides=(1,), padding=[(padding, padding)],
        dimension_numbers=("NCH", "OIH", "NCH"))
    scale = gamma / jnp.sqrt(running_var + eps)
    shift = beta - running_mean * scale
    y = y * scale[None, :, None] + shift[None, :, None]
    return jnp.maximum(y, 0.0)


if __name__ == "__main__":
    # Small shapes consistent with the module: N=2, C_in=4, C_out=8, L=16, k=3, pad=1.
    N, C_in, C_out, L, K, PAD = 2, 4, 8, 16, 3, 1
    L_out = L + 2 * PAD - K + 1

    key = jax.random.PRNGKey(0)
    kx, kw, kg, kb, km, kv = jax.random.split(key, 6)
    x = jax.random.normal(kx, (N, C_in, L), dtype=jnp.float32)
    weight = jax.random.normal(kw, (C_out, C_in, K), dtype=jnp.float32) * 0.1
    gamma = 1.0 + 0.1 * jax.random.normal(kg, (C_out,), dtype=jnp.float32)
    beta = 0.1 * jax.random.normal(kb, (C_out,), dtype=jnp.float32)
    running_mean = 0.1 * jax.random.normal(km, (C_out,), dtype=jnp.float32)
    running_var = jnp.abs(1.0 + 0.1 * jax.random.normal(kv, (C_out,), dtype=jnp.float32))

    ref = _reference(x, weight, gamma, beta, running_mean, running_var, padding=PAD)

    # Exact path: f32 MXU inputs + f32 output, tight tolerance.
    w32, sc, sh = prepare_basic_conv1d_params(
        weight, gamma, beta, running_mean, running_var, compute_dtype=jnp.float32)
    out_f32 = basic_conv1d(x, w32, sc, sh, padding=PAD,
                           compute_dtype=jnp.float32, out_dtype=jnp.float32)
    out_f32 = jax.block_until_ready(out_f32)
    assert out_f32.shape == (N, C_out, L_out)
    assert jnp.allclose(out_f32, ref, atol=1e-4, rtol=1e-4)

    # Fast default path: bf16 MXU inputs (f32 accumulate + f32 BN/ReLU epilogue), bf16 output.
    wbf, sc, sh = prepare_basic_conv1d_params(
        weight, gamma, beta, running_mean, running_var, compute_dtype=jnp.bfloat16)
    out_bf16 = basic_conv1d(x, wbf, sc, sh, padding=PAD,
                            compute_dtype=jnp.bfloat16, out_dtype=jnp.bfloat16)
    out_bf16 = jax.block_until_ready(out_bf16)
    assert out_bf16.shape == (N, C_out, L_out)
    assert jnp.allclose(out_bf16.astype(jnp.float32), ref, atol=5e-2, rtol=5e-2)

    print("KERNEL_OK")
</pallas_src>

<mosaic_0001>
module attributes {stable_mosaic.version = 11 : i64} {
  func.func @_basic_conv1d_kernel(%arg0: i32, %arg1: memref<4x128xf32, #tpu.memory_space<vmem>>, %arg2: memref<3x8x4xf32, #tpu.memory_space<vmem>>, %arg3: memref<8x1xf32, #tpu.memory_space<vmem>>, %arg4: memref<8x1xf32, #tpu.memory_space<vmem>>, %arg5: memref<8x128xf32, #tpu.memory_space<vmem>>) attributes {dimension_semantics = [#tpu.dimension_semantics<parallel>], iteration_bounds = array<i64: 1>, scalar_prefetch = 0 : i64, scratch_operands = 0 : i64, tpu.core_type = #tpu.core_type<tc>, window_params = [{transform_indices = @transform_0, window_bounds = array<i64: 4, 128>}, {pipeline_mode = #tpu.pipeline_mode<synchronous>, transform_indices = @transform_1, window_bounds = array<i64: 3, 8, 4>}, {pipeline_mode = #tpu.pipeline_mode<synchronous>, transform_indices = @transform_2, window_bounds = array<i64: 8, 1>}, {pipeline_mode = #tpu.pipeline_mode<synchronous>, transform_indices = @transform_3, window_bounds = array<i64: 8, 1>}, {transform_indices = @transform_4, window_bounds = array<i64: 8, 128>}]} {
    %c0 = arith.constant 0 : index
    %c0_0 = arith.constant 0 : index
    %0 = vector.load %arg1[%c0, %c0_0] : memref<4x128xf32, #tpu.memory_space<vmem>>, vector<4x128xf32>
    %c0_1 = arith.constant 0 : index
    %c0_2 = arith.constant 0 : index
    %c0_3 = arith.constant 0 : index
    %1 = vector.load %arg2[%c0_1, %c0_2, %c0_3] : memref<3x8x4xf32, #tpu.memory_space<vmem>>, vector<1x8x4xf32>
    %2 = vector.shape_cast %1 : vector<1x8x4xf32> to vector<8x4xf32>
    %cst = arith.constant dense<0.000000e+00> : vector<8x128xf32>
    %3 = tpu.matmul %2, %0, %cst {dimension_numbers = #tpu.dot_dimension_numbers<[1], [0], [0], [1], [0, 0, 1, 1], [], []>} : vector<8x4xf32>, vector<4x128xf32>, vector<8x128xf32> -> vector<8x128xf32>
    %c127_i32 = arith.constant 127 : i32
    %4 = tpu.dynamic_rotate %0 by %c127_i32 dim 1 : vector<4x128xf32>, i32 -> vector<4x128xf32>
    %c1 = arith.constant 1 : index
    %c0_4 = arith.constant 0 : index
    %c0_5 = arith.constant 0 : index
    %5 = vector.load %arg2[%c1, %c0_4, %c0_5] : memref<3x8x4xf32, #tpu.memory_space<vmem>>, vector<1x8x4xf32>
    %6 = vector.shape_cast %5 : vector<1x8x4xf32> to vector<8x4xf32>
    %cst_6 = arith.constant dense<0.000000e+00> : vector<8x128xf32>
    %7 = tpu.matmul %6, %4, %cst_6 {dimension_numbers = #tpu.dot_dimension_numbers<[1], [0], [0], [1], [0, 0, 1, 1], [], []>} : vector<8x4xf32>, vector<4x128xf32>, vector<8x128xf32> -> vector<8x128xf32>
    %8 = arith.addf %3, %7 : vector<8x128xf32>
    %c126_i32 = arith.constant 126 : i32
    %9 = tpu.dynamic_rotate %0 by %c126_i32 dim 1 : vector<4x128xf32>, i32 -> vector<4x128xf32>
    %c2 = arith.constant 2 : index
    %c0_7 = arith.constant 0 : index
    %c0_8 = arith.constant 0 : index
    %10 = vector.load %arg2[%c2, %c0_7, %c0_8] : memref<3x8x4xf32, #tpu.memory_space<vmem>>, vector<1x8x4xf32>
    %11 = vector.shape_cast %10 : vector<1x8x4xf32> to vector<8x4xf32>
    %cst_9 = arith.constant dense<0.000000e+00> : vector<8x128xf32>
    %12 = tpu.matmul %11, %9, %cst_9 {dimension_numbers = #tpu.dot_dimension_numbers<[1], [0], [0], [1], [0, 0, 1, 1], [], []>} : vector<8x4xf32>, vector<4x128xf32>, vector<8x128xf32> -> vector<8x128xf32>
    %13 = arith.addf %8, %12 : vector<8x128xf32>
    %c0_10 = arith.constant 0 : index
    %c0_11 = arith.constant 0 : index
    %14 = vector.load %arg3[%c0_10, %c0_11] : memref<8x1xf32, #tpu.memory_space<vmem>>, vector<8x1xf32>
    %15 = vector.broadcast %14 : vector<8x1xf32> to vector<8x128xf32>
    %16 = arith.mulf %13, %15 : vector<8x128xf32>
    %c0_12 = arith.constant 0 : index
    %c0_13 = arith.constant 0 : index
    %17 = vector.load %arg4[%c0_12, %c0_13] : memref<8x1xf32, #tpu.memory_space<vmem>>, vector<8x1xf32>
    %18 = vector.broadcast %17 : vector<8x1xf32> to vector<8x128xf32>
    %19 = arith.addf %16, %18 : vector<8x128xf32>
    %cst_14 = arith.constant 0.000000e+00 : f32
    %20 = vector.broadcast %cst_14 : f32 to vector<8x128xf32>
    %21 = arith.maximumf %19, %20 : vector<8x128xf32>
    %c0_15 = arith.constant 0 : index
    %c0_16 = arith.constant 0 : index
    %22 = vector.load %arg5[%c0_15, %c0_16] : memref<8x128xf32, #tpu.memory_space<vmem>>, vector<8x128xf32>
    tpu.vector_store %arg5[%c0_15, %c0_16], %21 {strides = array<i32>} : memref<8x128xf32, #tpu.memory_space<vmem>>, vector<8x128xf32>,
    return
  }
  func.func @transform_0(%arg0: i32) -> (i32, i32) {
    %c0_i32 = arith.constant 0 : i32
    %c0_i32_0 = arith.constant 0 : i32
    return %c0_i32, %arg0 : i32, i32
  }
  func.func @transform_1(%arg0: i32) -> (i32, i32, i32) {
    %c0_i32 = arith.constant 0 : i32
    %c0_i32_0 = arith.constant 0 : i32
    %c0_i32_1 = arith.constant 0 : i32
    %c0_i32_2 = arith.constant 0 : i32
    return %c0_i32, %c0_i32_0, %c0_i32_1 : i32, i32, i32
  }
  func.func @transform_2(%arg0: i32) -> (i32, i32) {
    %c0_i32 = arith.constant 0 : i32
    %c0_i32_0 = arith.constant 0 : i32
    %c0_i32_1 = arith.constant 0 : i32
    return %c0_i32, %c0_i32_0 : i32, i32
  }
  func.func @transform_3(%arg0: i32) -> (i32, i32) {
    %c0_i32 = arith.constant 0 : i32
    %c0_i32_0 = arith.constant 0 : i32
    %c0_i32_1 = arith.constant 0 : i32
    return %c0_i32, %c0_i32_0 : i32, i32
  }
  func.func @transform_4(%arg0: i32) -> (i32, i32) {
    %c0_i32 = arith.constant 0 : i32
    %c0_i32_0 = arith.constant 0 : i32
    return %c0_i32, %arg0 : i32, i32
  }
}

</mosaic_0001>

<llo_original>
// kernel: basic_conv1d.1
$region0: #{basic_conv1d.1}
  #allocation0 [shape = 'u32[]', space=smem, size = 0x4, offset = 0x4, fixed_abs, tag = 'smem constant byte address 0x4 - core index']
  #allocation1 [shape = 'u32[144,128]{1,0:T(1,128)}', space=vmem, size = 0x12000, scoped, tag = 'internal scratch']
  %s0 = inlined_call_operand.vmem [shape: f32[4,128], index: 0, kind: input, shape index: {}]
  %s1 = inlined_call_operand.vmem [shape: f32[3,8,4], index: 1, kind: input, shape index: {}]
  %s2 = inlined_call_operand.vmem [shape: f32[8,1], index: 2, kind: input, shape index: {}]
  %s3 = inlined_call_operand.vmem [shape: f32[8,1], index: 3, kind: input, shape index: {}]
  %s4 = inlined_call_operand.vmem [shape: f32[8,128], index: 4, kind: output, shape index: {}]
  %s5 = sld [smem:[#allocation0]]
  $region26: #{basic_conv1d.1} parent=0
    _
  %s7 = ssub.s32 1, %s5
  %s8 = scalar_select 0, %s7, %s5
  // Predicated region
  $region2: #{basic_conv1d.1} parent=0 // pred_check
    _
  $region3: #{basic_conv1d.1} parent=0 // pred_check_branch
    %10 = sbr.rel (0) target = $region5
  $region4: #{basic_conv1d.1} parent=0 // pred_region
    _
  $region5: #{basic_conv1d.1} parent=0 // pred_fallthru
    _
  // Predicated region
  $region6: #{basic_conv1d.1} parent=0 // pred_check
    _
  $region7: #{basic_conv1d.1} parent=0 // pred_check_branch
    %12 = sbr.rel (0) target = $region9
  $region8: #{basic_conv1d.1} parent=0 // pred_region
    _
  $region9: #{basic_conv1d.1} parent=0 // pred_fallthru
    _
  // Predicated region
  $region10: #{basic_conv1d.1} parent=0 // pred_check
    _
  $region11: #{basic_conv1d.1} parent=0 // pred_check_branch
    %14 = sbr.rel (0) target = $region13
  $region12: #{basic_conv1d.1} parent=0 // pred_region
    _
  $region13: #{basic_conv1d.1} parent=0 // pred_fallthru
    _
  // Predicated region
  $region14: #{basic_conv1d.1} parent=0 // pred_check
    _
  $region15: #{basic_conv1d.1} parent=0 // pred_check_branch
    %16 = sbr.rel (0) target = $region17
  $region16: #{basic_conv1d.1} parent=0 // pred_region
    _
  $region17: #{basic_conv1d.1} parent=0 // pred_fallthru
    _
  %v17 = vld [vmem:[%s0] sm:$0xf]
  %v18 = vld [vmem:[%s1] sm:$0xff]
  %19 = vrot.lane.b32.xlu0 %v17, 127
  %v20 = vpop.permute.xlu0 %19
  %s21 = scalar_lea.vmem %s1, 8
  %v22 = vld [vmem:[%s21] sm:$0xff]
  %vm23 = vcmask 31744
  %v25 = vsel %vm23, %v22, 0
  %vm27 = vcmask 1043456
  %v29 = vsel %vm27, %v20, 0
  %31 = vmatprep.subr.mxu0 0.0
  %32 = vmatpush1.msra.mxu0 0.0
  %33 = vmatprep.subr.mxu0 0.0
  %34 = vmatpush1.msra.mxu0 0.0
  %35 = vmatprep.subr.mxu0 0.0
  %36 = vmatpush1.msra.mxu0 0.0
  %37 = vmatprep.subr.mxu0 0.0
  %38 = vmatpush1.msra.mxu0 0.0
  %39 = vmatprep.subr.mxu0 0.0
  %40 = vmatpush1.msra.mxu0 0.0
  %41 = vmatprep.subr.mxu0 0.0
  %42 = vmatpush1.msra.mxu0 0.0
  %43 = vmatprep.subr.mxu0 0.0
  %44 = vmatpush1.msra.mxu0 0.0
  %45 = vmatprep.subr.mxu0 0.0
  %46 = vmatpush1.msra.mxu0 0.0
  %47 = vmatprep.subr.mxu0 0.0
  %48 = vmatpush1.msra.mxu0 0.0
  %49 = vmatprep.subr.mxu0 0.0
  %50 = vmatpush1.msra.mxu0 0.0
  %51 = vmatprep.subr.mxu0 0.0
  %52 = vmatpush1.msra.mxu0 0.0
  %53 = vmatprep.subr.mxu0 0.0
  %54 = vmatpush1.msra.mxu0 0.0
  %55 = vmatprep.subr.mxu0 0.0
  %56 = vmatpush1.msra.mxu0 0.0
  %57 = vmatprep.subr.mxu0 0.0
  %58 = vmatpush1.msra.mxu0 0.0
  %59 = vmatprep.subr.mxu0 0.0
  %60 = vmatpush1.msra.mxu0 0.0
  %61 = vmatprep.subr.mxu0 0.0
  %62 = vmatpush1.msra.mxu0 %v29
  %63 = vmatprep.subr.mxu0 0.0
  %64 = vmatpush2.msra.mxu0 0.0
  %65 = vmatprep.subr.mxu0 0.0
  %66 = vmatpush2.msra.mxu0 0.0
  %67 = vmatprep.subr.mxu0 0.0
  %68 = vmatpush2.msra.mxu0 0.0
  %69 = vmatprep.subr.mxu0 0.0
  %70 = vmatpush2.msra.mxu0 0.0
  %71 = vmatprep.subr.mxu0 0.0
  %72 = vmatpush2.msra.mxu0 0.0
  %73 = vmatprep.subr.mxu0 0.0
  %74 = vmatpush2.msra.mxu0 0.0
  %75 = vmatprep.subr.mxu0 0.0
  %76 = vmatpush2.msra.mxu0 0.0
  %77 = vmatprep.subr.mxu0 0.0
  %78 = vmatpush2.msra.mxu0 0.0
  %79 = vmatprep.subr.mxu0 0.0
  %80 = vmatpush2.msra.mxu0 0.0
  %81 = vmatprep.subr.mxu0 0.0
  %82 = vmatpush2.msra.mxu0 0.0
  %83 = vmatprep.subr.mxu0 0.0
  %84 = vmatpush2.msra.mxu0 0.0
  %85 = vmatprep.subr.mxu0 0.0
  %86 = vmatpush2.msra.mxu0 0.0
  %87 = vmatprep.subr.mxu0 0.0
  %88 = vmatpush2.msra.mxu0 0.0
  %89 = vmatprep.subr.mxu0 0.0
  %90 = vmatpush2.msra.mxu0 0.0
  %91 = vmatprep.subr.mxu0 0.0
  %92 = vmatpush2.msra.mxu0 0.0
  %93 = vmatprep.subr.mxu0 0.0
  %94 = vmatpush2.msra.mxu0 0.0
  %95 = vmatprep.mubr.f32.mxu0 0.0
  %96 = vmatmul.mubr.f32.gmra.mxu0 %v25
  %v97 = vpop.f32.mrf.mxu0
  %v98 = vadd.f32 0.0, %v97
  %v99 = vpop.f32.mrf.mxu0
  %100 = vdwg.mxu0
  %v102 = vsel %vm23, %v18, 0
  %v105 = vsel %vm27, %v17, 0
  %107 = vmatprep.subr.mxu0 0.0
  %108 = vmatpush1.msra.mxu0 0.0
  %109 = vmatprep.subr.mxu0 0.0
  %110 = vmatpush1.msra.mxu0 0.0
  %111 = vmatprep.subr.mxu0 0.0
  %112 = vmatpush1.msra.mxu0 0.0
  %113 = vmatprep.subr.mxu0 0.0
  %114 = vmatpush1.msra.mxu0 0.0
  %115 = vmatprep.subr.mxu0 0.0
  %116 = vmatpush1.msra.mxu0 0.0
  %117 = vmatprep.subr.mxu0 0.0
  %118 = vmatpush1.msra.mxu0 0.0
  %119 = vmatprep.subr.mxu0 0.0
  %120 = vmatpush1.msra.mxu0 0.0
  %121 = vmatprep.subr.mxu0 0.0
  %122 = vmatpush1.msra.mxu0 0.0
  %123 = vmatprep.subr.mxu0 0.0
  %124 = vmatpush1.msra.mxu0 0.0
  %125 = vmatprep.subr.mxu0 0.0
  %126 = vmatpush1.msra.mxu0 0.0
  %127 = vmatprep.subr.mxu0 0.0
  %128 = vmatpush1.msra.mxu0 0.0
  %129 = vmatprep.subr.mxu0 0.0
  %130 = vmatpush1.msra.mxu0 0.0
  %131 = vmatprep.subr.mxu0 0.0
  %132 = vmatpush1.msra.mxu0 0.0
  %133 = vmatprep.subr.mxu0 0.0
  %134 = vmatpush1.msra.mxu0 0.0
  %135 = vmatprep.subr.mxu0 0.0
  %136 = vmatpush1.msra.mxu0 0.0
  %137 = vmatprep.subr.mxu0 0.0
  %138 = vmatpush1.msra.mxu0 %v105
  %139 = vmatprep.subr.mxu0 0.0
  %140 = vmatpush2.msra.mxu0 0.0
  %141 = vmatprep.subr.mxu0 0.0
  %142 = vmatpush2.msra.mxu0 0.0
  %143 = vmatprep.subr.mxu0 0.0
  %144 = vmatpush2.msra.mxu0 0.0
  %145 = vmatprep.subr.mxu0 0.0
  %146 = vmatpush2.msra.mxu0 0.0
  %147 = vmatprep.subr.mxu0 0.0
  %148 = vmatpush2.msra.mxu0 0.0
  %149 = vmatprep.subr.mxu0 0.0
  %150 = vmatpush2.msra.mxu0 0.0
  %151 = vmatprep.subr.mxu0 0.0
  %152 = vmatpush2.msra.mxu0 0.0
  %153 = vmatprep.subr.mxu0 0.0
  %154 = vmatpush2.msra.mxu0 0.0
  %155 = vmatprep.subr.mxu0 0.0
  %156 = vmatpush2.msra.mxu0 0.0
  %157 = vmatprep.subr.mxu0 0.0
  %158 = vmatpush2.msra.mxu0 0.0
  %159 = vmatprep.subr.mxu0 0.0
  %160 = vmatpush2.msra.mxu0 0.0
  %161 = vmatprep.subr.mxu0 0.0
  %162 = vmatpush2.msra.mxu0 0.0
  %163 = vmatprep.subr.mxu0 0.0
  %164 = vmatpush2.msra.mxu0 0.0
  %165 = vmatprep.subr.mxu0 0.0
  %166 = vmatpush2.msra.mxu0 0.0
  %167 = vmatprep.subr.mxu0 0.0
  %168 = vmatpush2.msra.mxu0 0.0
  %169 = vmatprep.subr.mxu0 0.0
  %170 = vmatpush2.msra.mxu0 0.0
  %171 = vmatprep.mubr.f32.mxu0 0.0
  %172 = vmatmul.mubr.f32.gmra.mxu0 %v102
  %v173 = vpop.f32.mrf.mxu0
  %v174 = vadd.f32 %v98, %v173
  %v175 = vpop.f32.mrf.mxu0
  %176 = vdwg.mxu0
  %177 = vrot.lane.b32.xlu0 %v17, 126
  %v178 = vpop.permute.xlu0 %177
  %s179 = scalar_lea.vmem %s1, 16
  %v180 = vld [vmem:[%s179] sm:$0xff]
  %v182 = vsel %vm23, %v180, 0
  %v185 = vsel %vm27, %v178, 0
  %187 = vmatprep.subr.mxu0 0.0
  %188 = vmatpush1.msra.mxu0 0.0
  %189 = vmatprep.subr.mxu0 0.0
  %190 = vmatpush1.msra.mxu0 0.0
  %191 = vmatprep.subr.mxu0 0.0
  %192 = vmatpush1.msra.mxu0 0.0
  %193 = vmatprep.subr.mxu0 0.0
  %194 = vmatpush1.msra.mxu0 0.0
  %195 = vmatprep.subr.mxu0 0.0
  %196 = vmatpush1.msra.mxu0 0.0
  %197 = vmatprep.subr.mxu0 0.0
  %198 = vmatpush1.msra.mxu0 0.0
  %199 = vmatprep.subr.mxu0 0.0
  %200 = vmatpush1.msra.mxu0 0.0
  %201 = vmatprep.subr.mxu0 0.0
  %202 = vmatpush1.msra.mxu0 0.0
  %203 = vmatprep.subr.mxu0 0.0
  %204 = vmatpush1.msra.mxu0 0.0
  %205 = vmatprep.subr.mxu0 0.0
  %206 = vmatpush1.msra.mxu0 0.0
  %207 = vmatprep.subr.mxu0 0.0
  %208 = vmatpush1.msra.mxu0 0.0
  %209 = vmatprep.subr.mxu0 0.0
  %210 = vmatpush1.msra.mxu0 0.0
  %211 = vmatprep.subr.mxu0 0.0
  %212 = vmatpush1.msra.mxu0 0.0
  %213 = vmatprep.subr.mxu0 0.0
  %214 = vmatpush1.msra.mxu0 0.0
  %215 = vmatprep.subr.mxu0 0.0
  %216 = vmatpush1.msra.mxu0 0.0
  %217 = vmatprep.subr.mxu0 0.0
  %218 = vmatpush1.msra.mxu0 %v185
  %219 = vmatprep.subr.mxu0 0.0
  %220 = vmatpush2.msra.mxu0 0.0
  %221 = vmatprep.subr.mxu0 0.0
  %222 = vmatpush2.msra.mxu0 0.0
  %223 = vmatprep.subr.mxu0 0.0
  %224 = vmatpush2.msra.mxu0 0.0
  %225 = vmatprep.subr.mxu0 0.0
  %226 = vmatpush2.msra.mxu0 0.0
  %227 = vmatprep.subr.mxu0 0.0
  %228 = vmatpush2.msra.mxu0 0.0
  %229 = vmatprep.subr.mxu0 0.0
  %230 = vmatpush2.msra.mxu0 0.0
  %231 = vmatprep.subr.mxu0 0.0
  %232 = vmatpush2.msra.mxu0 0.0
  %233 = vmatprep.subr.mxu0 0.0
  %234 = vmatpush2.msra.mxu0 0.0
  %235 = vmatprep.subr.mxu0 0.0
  %236 = vmatpush2.msra.mxu0 0.0
  %237 = vmatprep.subr.mxu0 0.0
  %238 = vmatpush2.msra.mxu0 0.0
  %239 = vmatprep.subr.mxu0 0.0
  %240 = vmatpush2.msra.mxu0 0.0
  %241 = vmatprep.subr.mxu0 0.0
  %242 = vmatpush2.msra.mxu0 0.0
  %243 = vmatprep.subr.mxu0 0.0
  %244 = vmatpush2.msra.mxu0 0.0
  %245 = vmatprep.subr.mxu0 0.0
  %246 = vmatpush2.msra.mxu0 0.0
  %247 = vmatprep.subr.mxu0 0.0
  %248 = vmatpush2.msra.mxu0 0.0
  %249 = vmatprep.subr.mxu0 0.0
  %250 = vmatpush2.msra.mxu0 0.0
  %251 = vmatprep.mubr.f32.mxu0 0.0
  %252 = vmatmul.mubr.f32.gmra.mxu0 %v182
  %v253 = vpop.f32.mrf.mxu0
  %v254 = vadd.f32 0.0, %v253
  %v255 = vpop.f32.mrf.mxu0
  %256 = vdwg.mxu0
  %v257 = vadd.f32 %v174, %v254
  %v258 = vld [vmem:[%s2] sm:$0xff]
  %260 = vset.pattern.permute.xlu0 0
  %261 = vperm.xlu0 %260, %v258
  %v262 = vpop.permute.xlu0 %261
  %v264 = vmul.f32 %v257, %v262
  %v265 = vld [vmem:[%s3] sm:$0xff]
  %267 = vset.pattern.permute.xlu0 0
  %268 = vperm.xlu0 %267, %v265
  %v269 = vpop.permute.xlu0 %268
  %v271 = vadd.f32 %v264, %v269
  %v272 = vmax.f32 %v271, 0.0
  %273 = vst [vmem:[%s4] sm:$0xff] %v272
  // Predicated region
  $region18: #{basic_conv1d.1} parent=0 // pred_check
    _
  $region19: #{basic_conv1d.1} parent=0 // pred_check_branch
    %275 = sbr.rel (0) target = $region21
  $region20: #{basic_conv1d.1} parent=0 // pred_region
    _
  $region21: #{basic_conv1d.1} parent=0 // pred_fallthru
    _
  // Predicated region
  $region22: #{basic_conv1d.1} parent=0 // pred_check
    _
  $region23: #{basic_conv1d.1} parent=0 // pred_check_branch
    %277 = sbr.rel (0) target = $region25
  $region24: #{basic_conv1d.1} parent=0 // pred_region
    _
  $region25: #{basic_conv1d.1} parent=0 // pred_fallthru
    _

</llo_original>
